<compile_context>
chip_gen: v6e
topology: v6e:2x2x1
jax: 0.10.0
libtpu: 0.0.40
codegen_flags: <defaults>
</compile_context>

<pallas_src>
import jax
import jax.numpy as jnp
from jax.experimental import pallas as pl
from jax.experimental.pallas import tpu as pltpu


def _fused_matmul_kernel(x_ref, w_ref, b_ref, o_ref, acc_ref):
    # x_ref: (TB, TK), w_ref: (TK, N), b_ref: (1, N), o_ref: (TB, N), acc_ref: (TB, N) f32
    k = pl.program_id(1)

    @pl.when(k == 0)
    def _init():
        acc_ref[...] = jnp.zeros_like(acc_ref)

    # Contraction expressed directly (no materialized transpose); f32 MXU accumulation.
    acc_ref[...] += jnp.dot(x_ref[...], w_ref[...],
                            preferred_element_type=jnp.float32)

    @pl.when(k == pl.num_programs(1) - 1)
    def _finalize():
        o_ref[...] = (acc_ref[...] + b_ref[...]).astype(o_ref.dtype)


def _pick_k_tile(K):
    # Keep the whole contraction resident unless it is large; if splitting,
    # use a 128-aligned divisor so (8,128) tiling constraints hold.
    if K <= 2048:
        return K
    for tk in (2048, 1024, 512, 256, 128):
        if K % tk == 0:
            return tk
    return K


def linear_segregated(x, weight, bias, number_sublayers, *, b_tile=256):
    """
    x      : (B, S, F_in)            -- PyTorch-style input (before the .view)
    weight : (S*F_out, F_in, 1)      -- Conv1d weight layout (groups=S, kernel=1)
    bias   : (S*F_out,)              -- Conv1d bias
    returns: (B, S, F_out)
    """
    B, S, F_in = x.shape
    assert S == number_sublayers
    F_out = weight.shape[0] // S
    K = S * F_in
    N = S * F_out

    # ---- parameter prep (once, plain JAX glue) -------------------------------
    # Block-diagonal weight: W_blk[s*F_in + i, t*F_out + o] = w[s, o, i] * (s == t)
    w = weight.reshape(S, F_out, F_in)
    w_t = jnp.transpose(w, (0, 2, 1))                           # (S, F_in, F_out)
    sidx = jnp.arange(S)
    w_blk = (jnp.zeros((S, F_in, S, F_out), dtype=w.dtype)
             .at[sidx, :, sidx, :].set(w_t)
             .reshape(K, N))
    b_row = bias.astype(jnp.float32).reshape(1, N)              # lane-dense f32 bias

    # ---- activations: contiguous flatten, NO transpose -----------------------
    x2 = x.reshape(B, K)                                        # (B, S*F_in)

    # ---- tiling ---------------------------------------------------------------
    TB = B if B <= b_tile else b_tile
    Bp = -(-B // TB) * TB
    if Bp != B:
        x2 = jnp.pad(x2, ((0, Bp - B), (0, 0)))
    TK = _pick_k_tile(K)
    nb = Bp // TB
    nk = K // TK

    out2 = pl.pallas_call(
        _fused_matmul_kernel,
        out_shape=jax.ShapeDtypeStruct((Bp, N), x.dtype),
        grid_spec=pltpu.PrefetchScalarGridSpec(
            num_scalar_prefetch=0,
            grid=(nb, nk),
            in_specs=[
                pl.BlockSpec((TB, TK), lambda i, k: (i, k)),    # activations
                pl.BlockSpec((TK, N), lambda i, k: (k, 0)),     # weight (B-invariant)
                pl.BlockSpec((1, N), lambda i, k: (0, 0)),      # bias row
            ],
            out_specs=pl.BlockSpec((TB, N), lambda i, k: (i, 0)),
            scratch_shapes=[pltpu.VMEM((TB, N), jnp.float32)],
        ),
        compiler_params=pltpu.CompilerParams(
            dimension_semantics=("parallel", "arbitrary"),
        ),
    )(x2, w_blk, b_row)

    # (Bp, S*F_out) -> (B, S, F_out): slice off padding (no-op when Bp == B),
    # contiguous reshape back to the PyTorch output layout.
    return out2[:B].reshape(B, S, F_out)


if __name__ == "__main__":
    # Shapes consistent with the module's forward:
    #   batch=2, number_sublayers=4, in_features=32, out_features=32
    B, S, F_in, F_out = 2, 4, 32, 32

    key = jax.random.PRNGKey(0)
    kx, kw, kb = jax.random.split(key, 3)

    x = jax.random.normal(kx, (B, S, F_in), dtype=jnp.float32)
    # Conv1d(in=S*F_in, out=S*F_out, k=1, groups=S) parameter shapes:
    weight = jax.random.normal(kw, (S * F_out, F_in, 1), dtype=jnp.float32) * 0.1
    bias = jax.random.normal(kb, (S * F_out,), dtype=jnp.float32) * 0.1

    out = linear_segregated(x, weight, bias, S)
    out = jax.block_until_ready(out)

    # Pure-JAX reference of the grouped 1x1 conv forward.
    w_ref = weight.reshape(S, F_out, F_in)
    b_ref = bias.reshape(S, F_out)
    ref = jnp.einsum("bsi,soi->bso", x, w_ref) + b_ref[None, :, :]

    assert out.shape == (B, S, F_out)
    assert jnp.allclose(out, ref, atol=1e-5, rtol=1e-5)
    print("KERNEL_OK")
</pallas_src>

<mosaic_0001>
module attributes {stable_mosaic.version = 11 : i64} {
  func.func @_fused_matmul_kernel(%arg0: i32, %arg1: i32, %arg2: memref<2x128xf32, #tpu.memory_space<vmem>>, %arg3: memref<128x128xf32, #tpu.memory_space<vmem>>, %arg4: memref<1x128xf32, #tpu.memory_space<vmem>>, %arg5: memref<2x128xf32, #tpu.memory_space<vmem>>, %arg6: memref<2x128xf32, #tpu.memory_space<vmem>>) attributes {dimension_semantics = [#tpu.dimension_semantics<parallel>, #tpu.dimension_semantics<arbitrary>], iteration_bounds = array<i64: 1, 1>, scalar_prefetch = 0 : i64, scratch_operands = 1 : i64, tpu.core_type = #tpu.core_type<tc>, window_params = [{transform_indices = @transform_0, window_bounds = array<i64: 2, 128>}, {transform_indices = @transform_1, window_bounds = array<i64: 128, 128>}, {pipeline_mode = #tpu.pipeline_mode<synchronous>, transform_indices = @transform_2, window_bounds = array<i64: 1, 128>}, {transform_indices = @transform_3, window_bounds = array<i64: 2, 128>}]} {
    %c0_i32 = arith.constant 0 : i32
    %0 = arith.cmpi eq, %arg1, %c0_i32 : i32
    %1 = arith.extui %0 : i1 to i32
    %c0_i32_0 = arith.constant 0 : i32
    %2 = arith.cmpi ne, %1, %c0_i32_0 : i32
    scf.if %2 {
      %cst_10 = arith.constant 0.000000e+00 : f32
      %12 = vector.broadcast %cst_10 : f32 to vector<2x128xf32>
      %c0_11 = arith.constant 0 : index
      %c0_12 = arith.constant 0 : index
      %13 = vector.load %arg6[%c0_11, %c0_12] : memref<2x128xf32, #tpu.memory_space<vmem>>, vector<2x128xf32>
      tpu.vector_store %arg6[%c0_11, %c0_12], %12 {strides = array<i32>} : memref<2x128xf32, #tpu.memory_space<vmem>>, vector<2x128xf32>,
    } else {
    }
    %c0 = arith.constant 0 : index
    %c0_1 = arith.constant 0 : index
    %3 = vector.load %arg6[%c0, %c0_1] : memref<2x128xf32, #tpu.memory_space<vmem>>, vector<2x128xf32>
    %c0_2 = arith.constant 0 : index
    %c0_3 = arith.constant 0 : index
    %4 = vector.load %arg2[%c0_2, %c0_3] : memref<2x128xf32, #tpu.memory_space<vmem>>, vector<2x128xf32>
    %c0_4 = arith.constant 0 : index
    %c0_5 = arith.constant 0 : index
    %5 = vector.load %arg3[%c0_4, %c0_5] : memref<128x128xf32, #tpu.memory_space<vmem>>, vector<128x128xf32>
    %cst = arith.constant dense<0.000000e+00> : vector<2x128xf32>
    %6 = tpu.matmul %4, %5, %cst {dimension_numbers = #tpu.dot_dimension_numbers<[1], [0], [0], [1], [0, 0, 1, 1], [], []>} : vector<2x128xf32>, vector<128x128xf32>, vector<2x128xf32> -> vector<2x128xf32>
    %7 = arith.addf %3, %6 : vector<2x128xf32>
    %c0_6 = arith.constant 0 : index
    %c0_7 = arith.constant 0 : index
    %8 = vector.load %arg6[%c0_6, %c0_7] : memref<2x128xf32, #tpu.memory_space<vmem>>, vector<2x128xf32>
    tpu.vector_store %arg6[%c0_6, %c0_7], %7 {strides = array<i32>} : memref<2x128xf32, #tpu.memory_space<vmem>>, vector<2x128xf32>,
    %c0_i32_8 = arith.constant 0 : i32
    %9 = arith.cmpi eq, %arg1, %c0_i32_8 : i32
    %10 = arith.extui %9 : i1 to i32
    %c0_i32_9 = arith.constant 0 : i32
    %11 = arith.cmpi ne, %10, %c0_i32_9 : i32
    scf.if %11 {
      %c0_10 = arith.constant 0 : index
      %c0_11 = arith.constant 0 : index
      %12 = vector.load %arg6[%c0_10, %c0_11] : memref<2x128xf32, #tpu.memory_space<vmem>>, vector<2x128xf32>
      %c0_12 = arith.constant 0 : index
      %c0_13 = arith.constant 0 : index
      %13 = vector.load %arg4[%c0_12, %c0_13] : memref<1x128xf32, #tpu.memory_space<vmem>>, vector<1x128xf32>
      %14 = vector.broadcast %13 : vector<1x128xf32> to vector<2x128xf32>
      %15 = arith.addf %12, %14 : vector<2x128xf32>
      %c0_14 = arith.constant 0 : index
      %c0_15 = arith.constant 0 : index
      %16 = vector.load %arg5[%c0_14, %c0_15] : memref<2x128xf32, #tpu.memory_space<vmem>>, vector<2x128xf32>
      tpu.vector_store %arg5[%c0_14, %c0_15], %15 {strides = array<i32>} : memref<2x128xf32, #tpu.memory_space<vmem>>, vector<2x128xf32>,
    } else {
    }
    return
  }
  func.func @transform_0(%arg0: i32, %arg1: i32) -> (i32, i32) {
    %c0_i32 = arith.constant 0 : i32
    return %arg0, %arg1 : i32, i32
  }
  func.func @transform_1(%arg0: i32, %arg1: i32) -> (i32, i32) {
    %c0_i32 = arith.constant 0 : i32
    %c0_i32_0 = arith.constant 0 : i32
    return %arg1, %c0_i32 : i32, i32
  }
  func.func @transform_2(%arg0: i32, %arg1: i32) -> (i32, i32) {
    %c0_i32 = arith.constant 0 : i32
    %c0_i32_0 = arith.constant 0 : i32
    %c0_i32_1 = arith.constant 0 : i32
    return %c0_i32, %c0_i32_0 : i32, i32
  }
  func.func @transform_3(%arg0: i32, %arg1: i32) -> (i32, i32) {
    %c0_i32 = arith.constant 0 : i32
    %c0_i32_0 = arith.constant 0 : i32
    return %arg0, %c0_i32 : i32, i32
  }
}

</mosaic_0001>

<llo_original>
// kernel: tpu_custom_call.1
$region0: #{tpu_custom_call.1}
  #allocation0 [shape = 'u32[]', space=smem, size = 0x4, offset = 0x4, fixed_abs, tag = 'smem constant byte address 0x4 - core index']
  #allocation1 [shape = 'u32[144,128]{1,0:T(1,128)}', space=vmem, size = 0x12000, scoped, tag = 'internal scratch']
  #allocation2 [shape = 'f32[2,128]{1,0:T(2,128)}', space=vmem, size = 0x400, scoped, tag = 'scratch operand']
  %s0 = inlined_call_operand.hbm [shape: f32[2,128], index: 0, kind: input, shape index: {}]
  %s1 = inlined_call_operand.hbm [shape: f32[128,128], index: 1, kind: input, shape index: {}]
  %s2 = inlined_call_operand.vmem [shape: f32[1,128], index: 2, kind: input, shape index: {}]
  %s3 = inlined_call_operand.hbm [shape: f32[2,128], index: 3, kind: output, shape index: {}]
  %s4 = sld [smem:[#allocation0]]
  $region38: #{tpu_custom_call.1} parent=0
    _
  %s6 = ssub.s32 1, %s4
  %s7 = scalar_select 0, %s6, %s4
  $region1: #{tpu_custom_call.1} parent=0
    #allocation3 [shape = 'u8[1024]{0}', space=vmem, size = 0x400, scoped, tag = 'input window, operand 0, single buffered']
    #allocation4 [shape = 's32[1]{0}', space=sflag, size = 0x4, scoped, tag = 'scoped memory for tpu_custom_call.1']
    #allocation5 [shape = 's32[1]{0}', space=sflag, size = 0x4, scoped, tag = 'scoped memory for tpu_custom_call.1']
    #allocation6 [shape = 'u8[65536]{0}', space=vmem, size = 0x10000, scoped, tag = 'input window, operand 1, single buffered']
    #allocation7 [shape = 's32[1]{0}', space=sflag, size = 0x4, scoped, tag = 'scoped memory for tpu_custom_call.1']
    #allocation8 [shape = 'u8[1024]{0}', space=vmem, size = 0x400, scoped, tag = 'output window, operand 0, single buffered']
    %8 = vsyncpa [#allocation4], 0
    %9 = vsyncpa [#allocation7], 0
    %10 = vsyncpa [#allocation5], 0
    // Predicated region
    $region2: #{tpu_custom_call.1} parent=1 // pred_check
      _
    $region3: #{tpu_custom_call.1} parent=1 // pred_check_branch
      %12 = sbr.rel (0) target = $region5
    $region4: #{tpu_custom_call.1} parent=1 // pred_region
      %s14 = ssub.s32 32, 32
      %15 = vsyncadd [#allocation4], %s14
      %s17 = sshll.u32 [#allocation3], 4
      %s18 = int_to_ptr.vmem [resolvable:$true] %s17
      %20 = dma.hbm_to_vmem [thread:$0]  %s0, 32, %s18, [#allocation4]
    $region5: #{tpu_custom_call.1} parent=1 // pred_fallthru
      _
    // Predicated region
    $region6: #{tpu_custom_call.1} parent=1 // pred_check
      _
    $region7: #{tpu_custom_call.1} parent=1 // pred_check_branch
      %22 = sbr.rel (0) target = $region9
    $region8: #{tpu_custom_call.1} parent=1 // pred_region
      %s24 = ssub.s32 2048, 2048
      %25 = vsyncadd [#allocation7], %s24
      %s26 = sshll.u32 [#allocation6], 4
      %s27 = int_to_ptr.vmem [resolvable:$true] %s26
      %32 = dma.hbm_to_vmem [thread:$0]  %s1, 2048, %s27, [#allocation7], 128, 128, 8
    $region9: #{tpu_custom_call.1} parent=1 // pred_fallthru
      _
    // Predicated region
    $region10: #{tpu_custom_call.1} parent=1 // pred_check
      _
    $region11: #{tpu_custom_call.1} parent=1 // pred_check_branch
      %34 = sbr.rel (0) target = $region13
    $region12: #{tpu_custom_call.1} parent=1 // pred_region
      _
    $region13: #{tpu_custom_call.1} parent=1 // pred_fallthru
      _
    // Predicated region
    $region14: #{tpu_custom_call.1} parent=1 // pred_check
      _
    $region15: #{tpu_custom_call.1} parent=1 // pred_check_branch
      %36 = sbr.rel (0) target = $region17
    $region16: #{tpu_custom_call.1} parent=1 // pred_region
      %37 = dma.done [#allocation4], 32
    $region17: #{tpu_custom_call.1} parent=1 // pred_fallthru
      _
    // Predicated region
    $region18: #{tpu_custom_call.1} parent=1 // pred_check
      _
    $region19: #{tpu_custom_call.1} parent=1 // pred_check_branch
      %39 = sbr.rel (0) target = $region21
    $region20: #{tpu_custom_call.1} parent=1 // pred_region
      %40 = dma.done [#allocation7], 2048
    $region21: #{tpu_custom_call.1} parent=1 // pred_fallthru
      _
    %p41 = scmp.eq.s32.totalorder 0, 0
    // Predicated region
    $region22: #{tpu_custom_call.1} parent=1 // pred_check
      %p42 = pneg %p41
    $region23: #{tpu_custom_call.1} parent=1 // pred_check_branch
      %44 = sbr.rel (%p42) target = $region25
    $region24: #{tpu_custom_call.1} parent=1 // pred_region
      %45 = vst [vmem:[#allocation2] sm:$0x3] 0.0
    $region25: #{tpu_custom_call.1} parent=1 // pred_fallthru
      _
    %v46 = vld [vmem:[#allocation2] sm:$0x3]
    %v47 = vld [vmem:[#allocation3] sm:$0x3]
    %v48 = vld [vmem:[#allocation6] sm:$0xff]
    %v49 = vld [vmem:[#allocation6 + $0x8] sm:$0xff]
    %v50 = vld [vmem:[#allocation6 + $0x10] sm:$0xff]
    %v51 = vld [vmem:[#allocation6 + $0x18] sm:$0xff]
    %v52 = vld [vmem:[#allocation6 + $0x20] sm:$0xff]
    %v53 = vld [vmem:[#allocation6 + $0x28] sm:$0xff]
    %v54 = vld [vmem:[#allocation6 + $0x30] sm:$0xff]
    %v55 = vld [vmem:[#allocation6 + $0x38] sm:$0xff]
    %v56 = vld [vmem:[#allocation6 + $0x40] sm:$0xff]
    %v57 = vld [vmem:[#allocation6 + $0x48] sm:$0xff]
    %v58 = vld [vmem:[#allocation6 + $0x50] sm:$0xff]
    %v59 = vld [vmem:[#allocation6 + $0x58] sm:$0xff]
    %v60 = vld [vmem:[#allocation6 + $0x60] sm:$0xff]
    %v61 = vld [vmem:[#allocation6 + $0x68] sm:$0xff]
    %v62 = vld [vmem:[#allocation6 + $0x70] sm:$0xff]
    %v63 = vld [vmem:[#allocation6 + $0x78] sm:$0xff]
    %64 = vmatprep.subr.mxu0 0.0
    %65 = vmatpush1.msra.mxu0 %v63
    %66 = vmatprep.subr.mxu0 0.0
    %67 = vmatpush1.msra.mxu0 %v62
    %68 = vmatprep.subr.mxu0 0.0
    %69 = vmatpush1.msra.mxu0 %v61
    %70 = vmatprep.subr.mxu0 0.0
    %71 = vmatpush1.msra.mxu0 %v60
    %72 = vmatprep.subr.mxu0 0.0
    %73 = vmatpush1.msra.mxu0 %v59
    %74 = vmatprep.subr.mxu0 0.0
    %75 = vmatpush1.msra.mxu0 %v58
    %76 = vmatprep.subr.mxu0 0.0
    %77 = vmatpush1.msra.mxu0 %v57
    %78 = vmatprep.subr.mxu0 0.0
    %79 = vmatpush1.msra.mxu0 %v56
    %80 = vmatprep.subr.mxu0 0.0
    %81 = vmatpush1.msra.mxu0 %v55
    %82 = vmatprep.subr.mxu0 0.0
    %83 = vmatpush1.msra.mxu0 %v54
    %84 = vmatprep.subr.mxu0 0.0
    %85 = vmatpush1.msra.mxu0 %v53
    %86 = vmatprep.subr.mxu0 0.0
    %87 = vmatpush1.msra.mxu0 %v52
    %88 = vmatprep.subr.mxu0 0.0
    %89 = vmatpush1.msra.mxu0 %v51
    %90 = vmatprep.subr.mxu0 0.0
    %91 = vmatpush1.msra.mxu0 %v50
    %92 = vmatprep.subr.mxu0 0.0
    %93 = vmatpush1.msra.mxu0 %v49
    %94 = vmatprep.subr.mxu0 0.0
    %95 = vmatpush1.msra.mxu0 %v48
    %96 = vmatprep.subr.mxu0 0.0
    %97 = vmatpush2.msra.mxu0 0.0
    %98 = vmatprep.subr.mxu0 0.0
    %99 = vmatpush2.msra.mxu0 0.0
    %100 = vmatprep.subr.mxu0 0.0
    %101 = vmatpush2.msra.mxu0 0.0
    %102 = vmatprep.subr.mxu0 0.0
    %103 = vmatpush2.msra.mxu0 0.0
    %104 = vmatprep.subr.mxu0 0.0
    %105 = vmatpush2.msra.mxu0 0.0
    %106 = vmatprep.subr.mxu0 0.0
    %107 = vmatpush2.msra.mxu0 0.0
    %108 = vmatprep.subr.mxu0 0.0
    %109 = vmatpush2.msra.mxu0 0.0
    %110 = vmatprep.subr.mxu0 0.0
    %111 = vmatpush2.msra.mxu0 0.0
    %112 = vmatprep.subr.mxu0 0.0
    %113 = vmatpush2.msra.mxu0 0.0
    %114 = vmatprep.subr.mxu0 0.0
    %115 = vmatpush2.msra.mxu0 0.0
    %116 = vmatprep.subr.mxu0 0.0
    %117 = vmatpush2.msra.mxu0 0.0
    %118 = vmatprep.subr.mxu0 0.0
    %119 = vmatpush2.msra.mxu0 0.0
    %120 = vmatprep.subr.mxu0 0.0
    %121 = vmatpush2.msra.mxu0 0.0
    %122 = vmatprep.subr.mxu0 0.0
    %123 = vmatpush2.msra.mxu0 0.0
    %124 = vmatprep.subr.mxu0 0.0
    %125 = vmatpush2.msra.mxu0 0.0
    %126 = vmatprep.subr.mxu0 0.0
    %127 = vmatpush2.msra.mxu0 0.0
    %128 = vmatprep.mubr.f32.mxu0 0.0
    %129 = vmatmul.mubr.f32.gmra.mxu0 %v47
    %v130 = vpop.f32.mrf.mxu0
    %v131 = vadd.f32 0.0, %v130
    %v132 = vpop.f32.mrf.mxu0
    %133 = vdwg.mxu0
    %v134 = vadd.f32 %v46, %v131
    %135 = vst [vmem:[#allocation2] sm:$0x3] %v134
    // Predicated region
    $region26: #{tpu_custom_call.1} parent=1 // pred_check
      %p136 = pneg %p41
    $region27: #{tpu_custom_call.1} parent=1 // pred_check_branch
      %138 = sbr.rel (%p136) target = $region29
    $region28: #{tpu_custom_call.1} parent=1 // pred_region
      %v139 = vld [vmem:[#allocation2] sm:$0x3]
      %v140 = vld [vmem:[%s2] sm:$0x1]
      %v142 = vlaneseq
      %v143 = vshrl.u32 %v142, 7
      %v144 = vsub.s32 0, %v143
      %v145 = vrot.slane %v140, %v144
      %v147 = vadd.f32 %v139, %v145
      %148 = vst [vmem:[#allocation8] sm:$0x3] %v147
    $region29: #{tpu_custom_call.1} parent=1 // pred_fallthru
      _
    // Predicated region
    $region30: #{tpu_custom_call.1} parent=1 // pred_check
      _
    $region31: #{tpu_custom_call.1} parent=1 // pred_check_branch
      %150 = sbr.rel (0) target = $region33
    $region32: #{tpu_custom_call.1} parent=1 // pred_region
      %s152 = ssub.s32 32, 32
      %153 = vsyncadd [#allocation5], %s152
      %s155 = sshll.u32 [#allocation8], 4
      %s156 = int_to_ptr.vmem [resolvable:$true] %s155
      %158 = dma.vmem_to_hbm [thread:$0]  %s156, 32, %s3, [#allocation5]
    $region33: #{tpu_custom_call.1} parent=1 // pred_fallthru
      _
    // Predicated region
    $region34: #{tpu_custom_call.1} parent=1 // pred_check
      _
    $region35: #{tpu_custom_call.1} parent=1 // pred_check_branch
      %160 = sbr.rel (0) target = $region37
    $region36: #{tpu_custom_call.1} parent=1 // pred_region
      %161 = dma.done [#allocation5], 32
    $region37: #{tpu_custom_call.1} parent=1 // pred_fallthru
      _
    %162 = vsyncpa [#allocation4], 1
    %163 = vsyncpa [#allocation7], 1
    %164 = vsyncpa [#allocation5], 1

</llo_original>
